<compile_context>
chip_gen: v7x
topology: tpu7x:2x2x1
jax: 0.10.0
libtpu: 0.0.40
codegen_flags: <defaults>
</compile_context>

<pallas_src>
import jax
import jax.numpy as jnp
import numpy as np
from jax.experimental import pallas as pl
from jax.experimental.pallas import tpu as pltpu


def _make_kernel(tm, tk, n_pad, inv_scale):
    """tm/tk: adjacency row/contraction tile sizes; n_pad: padded node count;
    inv_scale = 1/(n_layers+1) (Python float -> folded multiply)."""

    def kernel(adj_ref, embr_ref, embc_ref, out_ref, ego_sc, acc_sc):
        k = pl.program_id(0)           # layer          (outer, sequential carry)
        m = pl.program_id(1)           # row tile
        kk = pl.program_id(2)          # contraction tile (innermost, reduction)
        last_k = pl.num_programs(0) - 1
        last_kk = pl.num_programs(2) - 1

        row = pl.multiple_of(m * tm, 16)
        col = pl.multiple_of(kk * tk, 16)

        # bf16 ping-pong ego carry in one flat (2*n_pad, D) scratch:
        # layer k reads half (k & 1) and writes the other half.
        half = (k & 1) * n_pad
        read_start = pl.multiple_of(half + col, 16)
        write_start = pl.multiple_of((n_pad - half) + row, 16)

        # Layer 0 reads the initial embeddings: seed the read half of the
        # carry just-in-time from the streamed bf16 column tile (no resident
        # emb block, no one-shot full-array init copy).
        @pl.when(k == 0)
        def _seed_ego0():
            ego_sc[pl.ds(col, tk), :] = embc_ref[...]

        # (tm, tk) bf16  @  (tk, D_pad) bf16  ->  (tm, D_pad) f32 on the MXU
        partial = jnp.dot(adj_ref[...],
                          ego_sc[pl.ds(read_start, tk), :],
                          preferred_element_type=jnp.float32)

        @pl.when(kk == 0)
        def _init_acc():
            acc_sc[...] = partial

        @pl.when(kk != 0)
        def _add_acc():
            acc_sc[...] = acc_sc[...] + partial

        @pl.when(kk == last_kk)
        def _finish_row_tile():
            new_tile = acc_sc[...]

            # stage ego_{k+1} rows for the next layer; skip on the last layer
            @pl.when(k != last_k)
            def _():
                ego_sc[pl.ds(write_start, tm), :] = new_tile.astype(ego_sc.dtype)

            # accumulate the mean numerator directly in the resident f32 output
            @pl.when(k == 0)
            def _():
                out_ref[pl.ds(row, tm), :] = embr_ref[...] + new_tile

            @pl.when(k != 0)
            def _():
                out_ref[pl.ds(row, tm), :] = out_ref[pl.ds(row, tm), :] + new_tile

            @pl.when(k == last_k)
            def _():
                out_ref[pl.ds(row, tm), :] = out_ref[pl.ds(row, tm), :] * inv_scale

    return kernel


def _vmem_budget_bytes():
    """~80% of physical VMEM: ~102 MiB on v5e/v6e (128 MiB), ~51 MiB on v7x (64 MiB)."""
    try:
        cap = int(pltpu.get_tpu_info().vmem_capacity_bytes)
    except Exception:
        cap = 64 * 1024 * 1024
    return int(cap * 0.8)


def _pick_tiles(n_pad, d_pad, budget_bytes):
    """Choose (tm, tk) so resident state + double-buffered streams fit the
    VMEM budget.  Prefer no K-tiling with the largest row tile; otherwise
    keep tm in the 256-512 sweet spot and shrink the contraction tile."""

    def legal_row(t):   # second-minor dim: multiple of 16 (bf16 sublanes) or full
        return t == n_pad or (t < n_pad and n_pad % t == 0 and t % 16 == 0)

    def legal_col(t):   # minor dim of the adjacency tile: multiple of 128 or full
        return t == n_pad or (t < n_pad and n_pad % t == 0 and t % 128 == 0)

    tm_opts = sorted({t for t in (n_pad, 1024, 512, 256, 128, 64, 32, 16)
                      if legal_row(t)}, reverse=True)
    tk_opts = sorted({t for t in (n_pad, 8192, 4096, 2048, 1024, 512, 256, 128)
                      if legal_col(t)}, reverse=True)

    def vmem_bytes(tm, tk):
        resident = n_pad * d_pad * 4 + 2 * n_pad * d_pad * 2   # out f32 + ego ping-pong bf16
        acc = tm * d_pad * 4                                   # contraction accumulator
        stream = 2 * (tm * tk * 2) + 2 * (tm * d_pad * 4) + 2 * (tk * d_pad * 2)
        return resident + acc + stream

    # 1) biggest row tile, no contraction tiling
    for tm in tm_opts:
        if tm >= min(256, n_pad) and vmem_bytes(tm, n_pad) <= budget_bytes:
            return tm, n_pad
    # 2) keep tm <= 512 and shrink tk instead
    for tm in (t for t in tm_opts if t <= 512):
        for tk in tk_opts:
            if vmem_bytes(tm, tk) <= budget_bytes:
                return tm, tk
    # 3) last resort (extreme N; see TODO about tiling the output rows)
    return tm_opts[-1], tk_opts[-1]


def sgl_encoder_forward(norm_adj, user_emb, item_emb, n_layers):
    """Dense-adjacency SGL graph encoder forward.

    norm_adj: (N, N) normalized adjacency (bf16 preferred), N = user_num + item_num.
    Returns (user_all_embeddings, item_all_embeddings)."""
    user_num = user_emb.shape[0]
    ego = jnp.concatenate([user_emb, item_emb], axis=0).astype(jnp.float32)
    N, D = ego.shape
    assert norm_adj.shape == (N, N)

    if n_layers == 0:   # mean of a single layer is the layer itself
        return ego[:user_num], ego[user_num:]

    # lane-dense embedding dim (multiple of 128) and bf16-friendly row count
    D_pad = ((D + 127) // 128) * 128
    N_pad = ((N + 15) // 16) * 16

    ego_p = ego if (N_pad, D_pad) == (N, D) else jnp.pad(
        ego, ((0, N_pad - N), (0, D_pad - D)))
    ego_bf = ego_p.astype(jnp.bfloat16)

    # adjacency should already arrive in bf16 (build_norm_adj emits bf16);
    # only cast/pad if strictly necessary.
    adj = norm_adj if norm_adj.dtype == jnp.bfloat16 else norm_adj.astype(jnp.bfloat16)
    if N_pad != N:
        adj = jnp.pad(adj, ((0, N_pad - N), (0, N_pad - N)))

    budget = _vmem_budget_bytes()
    tm, tk = _pick_tiles(N_pad, D_pad, budget)
    n_row, n_k = N_pad // tm, N_pad // tk
    inv_scale = 1.0 / float(n_layers + 1)

    kernel = _make_kernel(tm, tk, N_pad, inv_scale)

    flops = 2 * n_layers * N_pad * N_pad * D_pad
    bytes_accessed = (n_layers * N_pad * N_pad * 2          # adjacency stream (bf16)
                      + n_layers * N_pad * D_pad * (4 + 2)  # emb row / col streams
                      + N_pad * D_pad * 4)                  # output writeback

    out = pl.pallas_call(
        kernel,
        out_shape=jax.ShapeDtypeStruct((N_pad, D_pad), jnp.float32),
        grid_spec=pltpu.PrefetchScalarGridSpec(
            num_scalar_prefetch=0,
            grid=(n_layers, n_row, n_k),
            in_specs=[
                # adjacency tile streamed per (row-tile, k-tile) step
                pl.BlockSpec((tm, tk), lambda k, m, kk: (m, kk)),
                # f32 embedding rows: layer-0 term of the mean (full precision)
                pl.BlockSpec((tm, D_pad), lambda k, m, kk: (m, 0)),
                # bf16 embedding columns: layer-0 ego operand for the MXU
                pl.BlockSpec((tk, D_pad), lambda k, m, kk: (kk, 0)),
            ],
            # constant out index -> output stays VMEM-resident (accumulator)
            out_specs=pl.BlockSpec((N_pad, D_pad), lambda k, m, kk: (0, 0)),
            scratch_shapes=[
                pltpu.VMEM((2 * N_pad, D_pad), jnp.bfloat16),  # ping-pong ego carry
                pltpu.VMEM((tm, D_pad), jnp.float32),          # contraction accumulator
            ],
        ),
        compiler_params=pltpu.CompilerParams(
            dimension_semantics=("arbitrary", "arbitrary", "arbitrary"),
            vmem_limit_bytes=budget,
        ),
        cost_estimate=pl.CostEstimate(
            flops=flops, transcendentals=0, bytes_accessed=bytes_accessed),
    )(adj, ego_p, ego_bf)

    all_emb = out[:N, :D]
    return all_emb[:user_num], all_emb[user_num:]


def xavier_uniform(key, shape):
    fan_in, fan_out = shape[0], shape[1]
    limit = float(np.sqrt(6.0 / (fan_in + fan_out)))
    return jax.random.uniform(key, shape, jnp.float32, -limit, limit)


def build_norm_adj(key, user_num, item_num, density=0.15):
    """Dense symmetric normalized bipartite adjacency D^-1/2 A D^-1/2, emitted
    directly in bf16 so the kernel wrapper never re-reads the full f32 matrix."""
    N = user_num + item_num
    r = jax.random.uniform(key, (user_num, item_num))
    inter = (r < density).astype(jnp.float32)
    A = jnp.zeros((N, N), jnp.float32)
    A = A.at[:user_num, user_num:].set(inter)
    A = A.at[user_num:, :user_num].set(inter.T)
    deg = jnp.sum(A, axis=1)
    d_inv_sqrt = jnp.where(deg > 0, 1.0 / jnp.sqrt(jnp.maximum(deg, 1e-12)), 0.0)
    return (A * d_inv_sqrt[:, None] * d_inv_sqrt[None, :]).astype(jnp.bfloat16)


if __name__ == "__main__":
    # small, deterministic synthetic setup (mirrors SGL_Encoder.__init__ shapes)
    user_num, item_num, emb_size, n_layers = 24, 40, 32, 3
    N = user_num + item_num

    key = jax.random.PRNGKey(0)
    k_u, k_i, k_adj = jax.random.split(key, 3)

    user_emb = xavier_uniform(k_u, (user_num, emb_size))
    item_emb = xavier_uniform(k_i, (item_num, emb_size))
    norm_adj = build_norm_adj(k_adj, user_num, item_num)   # bf16

    user_all, item_all = sgl_encoder_forward(norm_adj, user_emb, item_emb, n_layers)
    user_all = jax.block_until_ready(user_all)
    item_all = jax.block_until_ready(item_all)

    # pure-JAX reference mimicking the kernel's bf16 adjacency / bf16 ego carry
    ego = jnp.concatenate([user_emb, item_emb], axis=0)
    adj_f32 = norm_adj.astype(jnp.float32)                 # already bf16-quantized
    ref_ego = ego
    ref_acc = ego
    for _ in range(n_layers):
        new = adj_f32 @ ref_ego.astype(jnp.bfloat16).astype(jnp.float32)
        ref_acc = ref_acc + new
        ref_ego = new
    ref = ref_acc / (n_layers + 1)

    got = jnp.concatenate([user_all, item_all], axis=0)
    np.testing.assert_allclose(np.asarray(got), np.asarray(ref),
                               rtol=1e-2, atol=1e-4)
    assert user_all.shape == (user_num, emb_size)
    assert item_all.shape == (item_num, emb_size)

    print("KERNEL_OK")
</pallas_src>

<mosaic_0001>
module attributes {stable_mosaic.version = 11 : i64} {
  func.func @kernel(%arg0: i32, %arg1: i32, %arg2: i32, %arg3: memref<64x64xbf16, #tpu.memory_space<vmem>>, %arg4: memref<64x128xf32, #tpu.memory_space<vmem>>, %arg5: memref<64x128xbf16, #tpu.memory_space<vmem>>, %arg6: memref<64x128xf32, #tpu.memory_space<vmem>>, %arg7: memref<128x128xbf16, #tpu.memory_space<vmem>>, %arg8: memref<64x128xf32, #tpu.memory_space<vmem>>) attributes {dimension_semantics = [#tpu.dimension_semantics<arbitrary>, #tpu.dimension_semantics<arbitrary>, #tpu.dimension_semantics<arbitrary>], iteration_bounds = array<i64: 3, 1, 1>, scalar_prefetch = 0 : i64, scratch_operands = 2 : i64, tpu.core_type = #tpu.core_type<tc>, window_params = [{transform_indices = @transform_0, window_bounds = array<i64: 64, 64>}, {transform_indices = @transform_1, window_bounds = array<i64: 64, 128>}, {transform_indices = @transform_2, window_bounds = array<i64: 64, 128>}, {pipeline_mode = #tpu.pipeline_mode<synchronous>, transform_indices = @transform_3, window_bounds = array<i64: 64, 128>}]} {
    %c64_i32 = arith.constant 64 : i32
    %0 = arith.muli %arg1, %c64_i32 : i32
    %1 = tpu.assume_multiple %0, 16 : i32
    %c64_i32_0 = arith.constant 64 : i32
    %2 = arith.muli %arg2, %c64_i32_0 : i32
    %3 = tpu.assume_multiple %2, 16 : i32
    %c1_i32 = arith.constant 1 : i32
    %4 = arith.andi %arg0, %c1_i32 : i32
    %c64_i32_1 = arith.constant 64 : i32
    %5 = arith.muli %4, %c64_i32_1 : i32
    %6 = arith.addi %5, %3 : i32
    %7 = tpu.assume_multiple %6, 16 : i32
    %c64_i32_2 = arith.constant 64 : i32
    %8 = arith.subi %c64_i32_2, %5 : i32
    %9 = arith.addi %8, %1 : i32
    %10 = tpu.assume_multiple %9, 16 : i32
    %c0_i32 = arith.constant 0 : i32
    %11 = arith.cmpi eq, %arg0, %c0_i32 : i32
    %12 = arith.extui %11 : i1 to i32
    %c0_i32_3 = arith.constant 0 : i32
    %13 = arith.cmpi ne, %12, %c0_i32_3 : i32
    scf.if %13 {
      %c0_12 = arith.constant 0 : index
      %c0_13 = arith.constant 0 : index
      %27 = vector.load %arg5[%c0_12, %c0_13] : memref<64x128xbf16, #tpu.memory_space<vmem>>, vector<64x128xbf16>
      %28 = arith.index_cast %3 : i32 to index
      %c0_14 = arith.constant 0 : index
      %29 = vector.load %arg7[%28, %c0_14] : memref<128x128xbf16, #tpu.memory_space<vmem>>, vector<64x128xbf16>
      tpu.vector_store %arg7[%28, %c0_14], %27 {strides = array<i32>} : memref<128x128xbf16, #tpu.memory_space<vmem>>, vector<64x128xbf16>,
    } else {
    }
    %c0 = arith.constant 0 : index
    %c0_4 = arith.constant 0 : index
    %14 = vector.load %arg3[%c0, %c0_4] : memref<64x64xbf16, #tpu.memory_space<vmem>>, vector<64x64xbf16>
    %15 = arith.index_cast %7 : i32 to index
    %c0_5 = arith.constant 0 : index
    %16 = vector.load %arg7[%15, %c0_5] : memref<128x128xbf16, #tpu.memory_space<vmem>>, vector<64x128xbf16>
    %cst = arith.constant dense<0.000000e+00> : vector<64x128xf32>
    %17 = tpu.matmul %14, %16, %cst {dimension_numbers = #tpu.dot_dimension_numbers<[1], [0], [0], [1], [0, 0, 1, 1], [], []>} : vector<64x64xbf16>, vector<64x128xbf16>, vector<64x128xf32> -> vector<64x128xf32>
    %c0_i32_6 = arith.constant 0 : i32
    %18 = arith.cmpi eq, %arg2, %c0_i32_6 : i32
    %19 = arith.extui %18 : i1 to i32
    %c0_i32_7 = arith.constant 0 : i32
    %20 = arith.cmpi ne, %19, %c0_i32_7 : i32
    scf.if %20 {
      %c0_12 = arith.constant 0 : index
      %c0_13 = arith.constant 0 : index
      %27 = vector.load %arg8[%c0_12, %c0_13] : memref<64x128xf32, #tpu.memory_space<vmem>>, vector<64x128xf32>
      tpu.vector_store %arg8[%c0_12, %c0_13], %17 {strides = array<i32>} : memref<64x128xf32, #tpu.memory_space<vmem>>, vector<64x128xf32>,
    } else {
    }
    %c0_i32_8 = arith.constant 0 : i32
    %21 = arith.cmpi ne, %arg2, %c0_i32_8 : i32
    %22 = arith.extui %21 : i1 to i32
    %c0_i32_9 = arith.constant 0 : i32
    %23 = arith.cmpi ne, %22, %c0_i32_9 : i32
    scf.if %23 {
      %c0_12 = arith.constant 0 : index
      %c0_13 = arith.constant 0 : index
      %27 = vector.load %arg8[%c0_12, %c0_13] : memref<64x128xf32, #tpu.memory_space<vmem>>, vector<64x128xf32>
      %28 = arith.addf %27, %17 : vector<64x128xf32>
      %c0_14 = arith.constant 0 : index
      %c0_15 = arith.constant 0 : index
      %29 = vector.load %arg8[%c0_14, %c0_15] : memref<64x128xf32, #tpu.memory_space<vmem>>, vector<64x128xf32>
      tpu.vector_store %arg8[%c0_14, %c0_15], %28 {strides = array<i32>} : memref<64x128xf32, #tpu.memory_space<vmem>>, vector<64x128xf32>,
    } else {
    }
    %c0_i32_10 = arith.constant 0 : i32
    %24 = arith.cmpi eq, %arg2, %c0_i32_10 : i32
    %25 = arith.extui %24 : i1 to i32
    %c0_i32_11 = arith.constant 0 : i32
    %26 = arith.cmpi ne, %25, %c0_i32_11 : i32
    scf.if %26 {
      %c0_12 = arith.constant 0 : index
      %c0_13 = arith.constant 0 : index
      %27 = vector.load %arg8[%c0_12, %c0_13] : memref<64x128xf32, #tpu.memory_space<vmem>>, vector<64x128xf32>
      %c2_i32 = arith.constant 2 : i32
      %28 = arith.cmpi ne, %arg0, %c2_i32 : i32
      %29 = arith.extui %28 : i1 to i32
      %c0_i32_14 = arith.constant 0 : i32
      %30 = arith.cmpi ne, %29, %c0_i32_14 : i32
      scf.if %30 {
        %40 = arith.truncf %27 : vector<64x128xf32> to vector<64x128xbf16>
        %41 = arith.index_cast %10 : i32 to index
        %c0_21 = arith.constant 0 : index
        %42 = vector.load %arg7[%41, %c0_21] : memref<128x128xbf16, #tpu.memory_space<vmem>>, vector<64x128xbf16>
        tpu.vector_store %arg7[%41, %c0_21], %40 {strides = array<i32>} : memref<128x128xbf16, #tpu.memory_space<vmem>>, vector<64x128xbf16>,
      } else {
      }
      %c0_i32_15 = arith.constant 0 : i32
      %31 = arith.cmpi eq, %arg0, %c0_i32_15 : i32
      %32 = arith.extui %31 : i1 to i32
      %c0_i32_16 = arith.constant 0 : i32
      %33 = arith.cmpi ne, %32, %c0_i32_16 : i32
      scf.if %33 {
        %c0_21 = arith.constant 0 : index
        %c0_22 = arith.constant 0 : index
        %40 = vector.load %arg4[%c0_21, %c0_22] : memref<64x128xf32, #tpu.memory_space<vmem>>, vector<64x128xf32>
        %41 = arith.addf %40, %27 : vector<64x128xf32>
        %42 = arith.index_cast %1 : i32 to index
        %c0_23 = arith.constant 0 : index
        %43 = vector.load %arg6[%42, %c0_23] : memref<64x128xf32, #tpu.memory_space<vmem>>, vector<64x128xf32>
        tpu.vector_store %arg6[%42, %c0_23], %41 {strides = array<i32>} : memref<64x128xf32, #tpu.memory_space<vmem>>, vector<64x128xf32>,
      } else {
      }
      %c0_i32_17 = arith.constant 0 : i32
      %34 = arith.cmpi ne, %arg0, %c0_i32_17 : i32
      %35 = arith.extui %34 : i1 to i32
      %c0_i32_18 = arith.constant 0 : i32
      %36 = arith.cmpi ne, %35, %c0_i32_18 : i32
      scf.if %36 {
        %40 = arith.index_cast %1 : i32 to index
        %c0_21 = arith.constant 0 : index
        %41 = vector.load %arg6[%40, %c0_21] : memref<64x128xf32, #tpu.memory_space<vmem>>, vector<64x128xf32>
        %42 = arith.addf %41, %27 : vector<64x128xf32>
        %43 = arith.index_cast %1 : i32 to index
        %c0_22 = arith.constant 0 : index
        %44 = vector.load %arg6[%43, %c0_22] : memref<64x128xf32, #tpu.memory_space<vmem>>, vector<64x128xf32>
        tpu.vector_store %arg6[%43, %c0_22], %42 {strides = array<i32>} : memref<64x128xf32, #tpu.memory_space<vmem>>, vector<64x128xf32>,
      } else {
      }
      %c2_i32_19 = arith.constant 2 : i32
      %37 = arith.cmpi eq, %arg0, %c2_i32_19 : i32
      %38 = arith.extui %37 : i1 to i32
      %c0_i32_20 = arith.constant 0 : i32
      %39 = arith.cmpi ne, %38, %c0_i32_20 : i32
      scf.if %39 {
        %40 = arith.index_cast %1 : i32 to index
        %c0_21 = arith.constant 0 : index
        %41 = vector.load %arg6[%40, %c0_21] : memref<64x128xf32, #tpu.memory_space<vmem>>, vector<64x128xf32>
        %cst_22 = arith.constant 2.500000e-01 : f32
        %42 = vector.broadcast %cst_22 : f32 to vector<64x128xf32>
        %43 = arith.mulf %41, %42 : vector<64x128xf32>
        %44 = arith.index_cast %1 : i32 to index
        %c0_23 = arith.constant 0 : index
        %45 = vector.load %arg6[%44, %c0_23] : memref<64x128xf32, #tpu.memory_space<vmem>>, vector<64x128xf32>
        tpu.vector_store %arg6[%44, %c0_23], %43 {strides = array<i32>} : memref<64x128xf32, #tpu.memory_space<vmem>>, vector<64x128xf32>,
      } else {
      }
    } else {
    }
    return
  }
  func.func @transform_0(%arg0: i32, %arg1: i32, %arg2: i32) -> (i32, i32) {
    %c0_i32 = arith.constant 0 : i32
    return %arg1, %arg2 : i32, i32
  }
  func.func @transform_1(%arg0: i32, %arg1: i32, %arg2: i32) -> (i32, i32) {
    %c0_i32 = arith.constant 0 : i32
    %c0_i32_0 = arith.constant 0 : i32
    return %arg1, %c0_i32 : i32, i32
  }
  func.func @transform_2(%arg0: i32, %arg1: i32, %arg2: i32) -> (i32, i32) {
    %c0_i32 = arith.constant 0 : i32
    %c0_i32_0 = arith.constant 0 : i32
    return %arg2, %c0_i32 : i32, i32
  }
  func.func @transform_3(%arg0: i32, %arg1: i32, %arg2: i32) -> (i32, i32) {
    %c0_i32 = arith.constant 0 : i32
    %c0_i32_0 = arith.constant 0 : i32
    %c0_i32_1 = arith.constant 0 : i32
    return %c0_i32, %c0_i32_0 : i32, i32
  }
}

</mosaic_0001>

<llo_original>
// kernel: tpu_custom_call.1
$region0: #{tpu_custom_call.1}
  #allocation0 [shape = 'u32[]', space=smem, size = 0x4, offset = 0x4, fixed_abs, tag = 'smem constant byte address 0x4 - core index']
  #allocation1 [shape = 'u32[144,128]{1,0:T(1,128)}', space=vmem, size = 0x12000, scoped, tag = 'internal scratch']
  #allocation2 [shape = 'bf16[128,128]{1,0:T(16,128)(2,1)}', space=vmem, size = 0x8000, scoped, tag = 'scratch operand']
  #allocation3 [shape = 'f32[64,128]{1,0:T(8,128)}', space=vmem, size = 0x8000, scoped, tag = 'scratch operand']
  %s0 = inlined_call_operand.hbm [shape: bf16[64,64], index: 0, kind: input, shape index: {}]
  %s1 = inlined_call_operand.hbm [shape: f32[64,128], index: 1, kind: input, shape index: {}]
  %s2 = inlined_call_operand.hbm [shape: bf16[64,128], index: 2, kind: input, shape index: {}]
  %s3 = inlined_call_operand.hbm [shape: f32[64,128], index: 3, kind: output, shape index: {}]
  %s4 = sld [smem:[#allocation0]]
  $region89: #{tpu_custom_call.1} parent=0
    _
  %s6 = ssub.s32 1, %s4
  %s7 = scalar_select 0, %s6, %s4
  $region1: #{tpu_custom_call.1} parent=0
    #allocation4 [shape = 'u8[16384]{0}', space=vmem, size = 0x4000, scoped, tag = 'input window, operand 0, single buffered']
    #allocation5 [shape = 's32[2]{0}', space=sflag, size = 0x8, scoped, tag = 'scoped memory for tpu_custom_call.1']
    #allocation6 [shape = 's32[2]{0}', space=sflag, size = 0x8, scoped, tag = 'scoped memory for tpu_custom_call.1']
    #allocation7 [shape = 'u8[32768]{0}', space=vmem, size = 0x8000, scoped, tag = 'input window, operand 1, single buffered']
    #allocation8 [shape = 's32[1]{0}', space=sflag, size = 0x4, scoped, tag = 'scoped memory for tpu_custom_call.1']
    #allocation9 [shape = 'u8[16384]{0}', space=vmem, size = 0x4000, scoped, tag = 'input window, operand 2, single buffered']
    #allocation10 [shape = 'u8[32768]{0}', space=vmem, size = 0x8000, scoped, tag = 'output window, operand 0, single buffered']
    %8 = vsyncpa [#allocation5], 0
    %9 = vsyncpa [#allocation8], 0
    %10 = vsyncpa [#allocation6], 0
    loop: start=0, step=1, limit=5
    $region2: #{tpu_custom_call.1} parent=1 // loop_pre_header
      _
    $region3: #{tpu_custom_call.1} parent=1 // loop_header
      %s12 = sphi 0, %s16
      %p13 = scmp.ge.s32.totalorder %s12, 5
      %s19 = sphi 0, %s38
      %s20 = sphi 0, %s34
      %s21 = sphi 0, %s30
      %s22 = sphi 0, %s19
      %s23 = sphi 0, %s20
      %s24 = sphi 0, %s21
      %s25 = sphi 0, %s22
      %s26 = sphi 0, %s23
      %s27 = sphi 0, %s24
      %s43 = sphi 0, %s45
      %s46 = sphi 0, %s43
      %s47 = sphi 0, %s46
      %s63 = sphi 0, %s47
      %s69 = sphi 0, %s71
      %s72 = sphi 0, %s69
      %s73 = sphi 0, %s72
      %s89 = sphi 0, %s73
      %s95 = sphi 0, %s97
      %s98 = sphi 0, %s95
      %s99 = sphi 0, %s98
      %s115 = sphi 0, %s99
      %s119 = sphi 0, %s119
      %s121 = sphi 0, %s119
      %s122 = sphi 0, %s121
      %s136 = sphi 0, %s122
    $region4: #{tpu_custom_call.1} parent=1 // loop_header_branch
      %15 = sbr.rel (%p13) target = $region8
    $region5: #{tpu_custom_call.1} parent=1 // loop_body
      %s17 = ssub.s32 %s12, 1
      %s18 = ssub.s32 %s12, 2
      %s28 = sadd.s32 1, %s21
      %p29 = scmp.ge.s32.totalorder %s28, 1
      %s30 = scalar_select %p29, 0, %s28
      %s31 = sadd.s32 1, %s20
      %s32 = scalar_select %p29, %s31, %s20
      %p33 = scmp.ge.s32.totalorder %s32, 1
      %s34 = scalar_select %p33, 0, %s32
      %s35 = sadd.s32 1, %s19
      %s36 = scalar_select %p33, %s35, %s19
      %p37 = scmp.ge.s32.totalorder %s36, 3
      %s38 = scalar_select %p37, 0, %s36
      %s39 = ssub.s32 %s20, %s34
      %s40 = ssub.s32 %s21, %s30
      %s41 = sor.u32 %s39, %s40
      %p42 = scmp.eq.s32.totalorder %s41, 0
      %s44 = sadd.s32 %s43, 1
      %s45 = scalar_select %p42, %s43, %s44
      %p48 = pneg %p42
      %p49 = scmp.eq.s32.totalorder %s12, 2
      %p50 = por %p48, %p49
      %p51 = scmp.ne.s32.totalorder %s43, %s46
      %p52 = scmp.eq.s32.totalorder %s12, 0
      %p53 = por %p51, %p52
      %p54 = scmp.ne.s32.totalorder %s43, %s46
      %p55 = scmp.eq.s32.totalorder %s17, 2
      %p56 = por %p54, %p55
      %p57 = scmp.ne.s32.totalorder %s46, %s47
      %p58 = scmp.eq.s32.totalorder %s17, 0
      %p59 = por %p57, %p58
      %p60 = scmp.ne.s32.totalorder %s46, %s47
      %p61 = scmp.eq.s32.totalorder %s18, 2
      %p62 = por %p60, %p61
      %p64 = scmp.ne.s32.totalorder %s47, %s63
      %p65 = scmp.eq.s32.totalorder %s18, 0
      %p66 = por %p64, %p65
      %s67 = ssub.s32 %s20, %s34
      %p68 = scmp.eq.s32.totalorder %s67, 0
      %s70 = sadd.s32 %s69, 1
      %s71 = scalar_select %p68, %s69, %s70
      %p74 = pneg %p68
      %p75 = scmp.eq.s32.totalorder %s12, 2
      %p76 = por %p74, %p75
      %p77 = scmp.ne.s32.totalorder %s69, %s72
      %p78 = scmp.eq.s32.totalorder %s12, 0
      %p79 = por %p77, %p78
      %p80 = scmp.ne.s32.totalorder %s69, %s72
      %p81 = scmp.eq.s32.totalorder %s17, 2
      %p82 = por %p80, %p81
      %p83 = scmp.ne.s32.totalorder %s72, %s73
      %p84 = scmp.eq.s32.totalorder %s17, 0
      %p85 = por %p83, %p84
      %p86 = scmp.ne.s32.totalorder %s72, %s73
      %p87 = scmp.eq.s32.totalorder %s18, 2
      %p88 = por %p86, %p87
      %p90 = scmp.ne.s32.totalorder %s73, %s89
      %p91 = scmp.eq.s32.totalorder %s18, 0
      %p92 = por %p90, %p91
      %s93 = ssub.s32 %s21, %s30
      %p94 = scmp.eq.s32.totalorder %s93, 0
      %s96 = sadd.s32 %s95, 1
      %s97 = scalar_select %p94, %s95, %s96
      %p100 = pneg %p94
      %p101 = scmp.eq.s32.totalorder %s12, 2
      %p102 = por %p100, %p101
      %p103 = scmp.ne.s32.totalorder %s95, %s98
      %p104 = scmp.eq.s32.totalorder %s12, 0
      %p105 = por %p103, %p104
      %p106 = scmp.ne.s32.totalorder %s95, %s98
      %p107 = scmp.eq.s32.totalorder %s17, 2
      %p108 = por %p106, %p107
      %p109 = scmp.ne.s32.totalorder %s98, %s99
      %p110 = scmp.eq.s32.totalorder %s17, 0
      %p111 = por %p109, %p110
      %p112 = scmp.ne.s32.totalorder %s98, %s99
      %p113 = scmp.eq.s32.totalorder %s18, 2
      %p114 = por %p112, %p113
      %p116 = scmp.ne.s32.totalorder %s99, %s115
      %p117 = scmp.eq.s32.totalorder %s18, 0
      %p118 = por %p116, %p117
      %s120 = sadd.s32 %s119, 1
      %p123 = scmp.eq.s32.totalorder %s12, 2
      %p124 = scmp.ne.s32.totalorder %s119, %s121
      %p125 = scmp.eq.s32.totalorder %s12, 0
      %p126 = por %p124, %p125
      %p127 = scmp.ne.s32.totalorder %s119, %s121
      %p128 = scmp.eq.s32.totalorder %s17, 2
      %p129 = por %p127, %p128
      %p130 = scmp.ne.s32.totalorder %s121, %s122
      %p131 = scmp.eq.s32.totalorder %s17, 0
      %p132 = por %p130, %p131
      %p133 = scmp.ne.s32.totalorder %s121, %s122
      %p134 = scmp.eq.s32.totalorder %s18, 2
      %p135 = por %p133, %p134
      %p137 = scmp.ne.s32.totalorder %s122, %s136
      %p138 = scmp.eq.s32.totalorder %s18, 0
      %p139 = por %p137, %p138
      %p140 = scmp.le.s32.totalorder 1, %s12
      %p141 = scmp.lt.s32.totalorder %s12, 4
      %p142 = pnand %p140, %p141
      %p143 = pneg %p142
      // Predicated region
      $region9: #{tpu_custom_call.1} parent=5 // pred_check
        _
      $region10: #{tpu_custom_call.1} parent=5 // pred_check_branch
        %145 = sbr.rel (%p142) target = $region12
      $region11: #{tpu_custom_call.1} parent=5 // pred_region
        %s146 = ssub.s32 %s12, 1
        // Predicated region
        $region13: #{tpu_custom_call.1} parent=11 // pred_check
          %p147 = pneg %p59
        $region14: #{tpu_custom_call.1} parent=11 // pred_check_branch
          %149 = sbr.rel (%p147) target = $region16
        $region15: #{tpu_custom_call.1} parent=11 // pred_region
          %s150 = smul.u32 8, %s23
          %s152 = ssub.s32 512, 512
          %153 = vsyncadd [#allocation5], %s152
          %s154 = sadd.s32 %s24, %s150
          %s155 = smul.addr %s154, 64
          %s156 = scalar_lea.hbm %s0, %s155
          %s157 = sshll.u32 [#allocation4], 4
          %s158 = int_to_ptr.vmem [resolvable:$true] %s157
          %163 = dma.hbm_to_vmem [thread:$0]  %s156, 512, %s158, [#allocation5], 64, 64, 4
        $region16: #{tpu_custom_call.1} parent=11 // pred_fallthru
          _
        // Predicated region
        $region17: #{tpu_custom_call.1} parent=11 // pred_check
          %p164 = pneg %p85
        $region18: #{tpu_custom_call.1} parent=11 // pred_check_branch
          %166 = sbr.rel (%p164) target = $region20
        $region19: #{tpu_custom_call.1} parent=11 // pred_region
          %s167 = smul.u32 8, %s23
          %s169 = ssub.s32 1024, 1024
          %170 = vsyncadd [#allocation8], %s169
          %s171 = smul.addr %s167, 128
          %s172 = scalar_lea.hbm %s1, %s171
          %s173 = sshll.u32 [#allocation7], 4
          %s174 = int_to_ptr.vmem [resolvable:$true] %s173
          %179 = dma.hbm_to_vmem [thread:$0]  %s172, 1024, %s174, [#allocation8], 128, 128, 8
        $region20: #{tpu_custom_call.1} parent=11 // pred_fallthru
          _
        // Predicated region
        $region21: #{tpu_custom_call.1} parent=11 // pred_check
          %p180 = pneg %p111
        $region22: #{tpu_custom_call.1} parent=11 // pred_check_branch
          %182 = sbr.rel (%p180) target = $region24
        $region23: #{tpu_custom_call.1} parent=11 // pred_region
          %s183 = smul.u32 8, %s24
          %s185 = ssub.s32 512, 512
          %186 = vsyncadd [#allocation8], %s185
          %s187 = smul.addr %s183, 64
          %s188 = scalar_lea.hbm %s2, %s187
          %s189 = sshll.u32 [#allocation9], 4
          %s190 = int_to_ptr.vmem [resolvable:$true] %s189
          %195 = dma.hbm_to_vmem [thread:$0]  %s188, 512, %s190, [#allocation8], 64, 64, 4
        $region24: #{tpu_custom_call.1} parent=11 // pred_fallthru
          _
      $region12: #{tpu_custom_call.1} parent=5 // pred_fallthru
        _
      %p196 = scmp.lt.s32.totalorder %s12, 3
      // Predicated region
      $region25: #{tpu_custom_call.1} parent=5 // pred_check
        %p197 = pneg %p196
      $region26: #{tpu_custom_call.1} parent=5 // pred_check_branch
        %199 = sbr.rel (%p197) target = $region28
      $region27: #{tpu_custom_call.1} parent=5 // pred_region
        _
      $region28: #{tpu_custom_call.1} parent=5 // pred_fallthru
        _
      %p200 = scmp.le.s32.totalorder 1, %s12
      %p201 = scmp.lt.s32.totalorder %s12, 4
      %p202 = pnand %p200, %p201
      %p203 = pneg %p202
      // Predicated region
      $region29: #{tpu_custom_call.1} parent=5 // pred_check
        _
      $region30: #{tpu_custom_call.1} parent=5 // pred_check_branch
        %205 = sbr.rel (%p202) target = $region32
      $region31: #{tpu_custom_call.1} parent=5 // pred_region
        %s206 = ssub.s32 %s12, 1
        // Predicated region
        $region33: #{tpu_custom_call.1} parent=31 // pred_check
          %p207 = pneg %p59
        $region34: #{tpu_custom_call.1} parent=31 // pred_check_branch
          %209 = sbr.rel (%p207) target = $region36
        $region35: #{tpu_custom_call.1} parent=31 // pred_region
          %210 = dma.done [#allocation5], 512
        $region36: #{tpu_custom_call.1} parent=31 // pred_fallthru
          _
        // Predicated region
        $region37: #{tpu_custom_call.1} parent=31 // pred_check
          %p211 = pneg %p85
        $region38: #{tpu_custom_call.1} parent=31 // pred_check_branch
          %213 = sbr.rel (%p211) target = $region40
        $region39: #{tpu_custom_call.1} parent=31 // pred_region
          %214 = dma.done [#allocation8], 1024
        $region40: #{tpu_custom_call.1} parent=31 // pred_fallthru
          _
        // Predicated region
        $region41: #{tpu_custom_call.1} parent=31 // pred_check
          %p215 = pneg %p111
        $region42: #{tpu_custom_call.1} parent=31 // pred_check_branch
          %217 = sbr.rel (%p215) target = $region44
        $region43: #{tpu_custom_call.1} parent=31 // pred_region
          %218 = dma.done [#allocation8], 512
        $region44: #{tpu_custom_call.1} parent=31 // pred_fallthru
          _
        %p219 = pneg %p59
        %p220 = pneg %p56
        %p221 = pneg %p85
        %p222 = pneg %p82
        %p223 = pneg %p111
        %p224 = pneg %p108
        %p225 = pneg %p132
        %p226 = pneg %p129
        %s227 = smul.u32 8, %s23
        %s228 = smul.u32 8, %s23
        %s229 = smul.u32 8, %s24
        %s231 = smul.u32 %s23, 64
        %s232 = smul.u32 %s24, 64
        %s233 = sand.u32 %s22, 1
        %s234 = smul.u32 %s233, 64
        %s235 = sadd.s32 %s234, %s232
        %s236 = ssub.s32 64, %s234
        %s237 = sadd.s32 %s236, %s231
        %p238 = scmp.eq.s32.totalorder %s22, 0
        // Predicated region
        $region45: #{tpu_custom_call.1} parent=31 // pred_check
          %p239 = pneg %p238
        $region46: #{tpu_custom_call.1} parent=31 // pred_check_branch
          %241 = sbr.rel (%p239) target = $region48
        $region47: #{tpu_custom_call.1} parent=31 // pred_region
          %v242 = vld [vmem:[#allocation9] sm:$0xf]
          %v243 = vld [vmem:[#allocation9 + $0x4] sm:$0xf]
          %v244 = vld [vmem:[#allocation9 + $0x8] sm:$0xf]
          %v245 = vld [vmem:[#allocation9 + $0xc] sm:$0xf]
          %v246 = vld [vmem:[#allocation9 + $0x10] sm:$0xf]
          %v247 = vld [vmem:[#allocation9 + $0x14] sm:$0xf]
          %v248 = vld [vmem:[#allocation9 + $0x18] sm:$0xf]
          %v249 = vld [vmem:[#allocation9 + $0x1c] sm:$0xf]
          %v258 = vunpack.c.l.b16 %v242
          %v259 = vunpack.c.l.b16 %v243
          %v260 = vunpack.c.l.b16 %v244
          %v261 = vunpack.c.l.b16 %v245
          %v262 = vunpack.c.l.b16 %v246
          %v263 = vunpack.c.l.b16 %v247
          %v264 = vunpack.c.l.b16 %v248
          %v265 = vunpack.c.l.b16 %v249
          %v266 = vpack.c.b16 %v259, %v258
          %v267 = vpack.c.b16 %v261, %v260
          %v268 = vpack.c.b16 %v263, %v262
          %v269 = vpack.c.b16 %v265, %v264
          %s274 = sshra.s32 %s232, 4
          %s275 = sand.u32 %s232, 15
          %s276 = smul.addr %s274, 8
          %s277 = scalar_lea.vmem [#allocation2], %s276
          %278 = vst [vmem:[%s277] sm:$0xff] %v266
          %279 = vst [vmem:[%s277 + $0x8] sm:$0xff] %v267
          %280 = vst [vmem:[%s277 + $0x10] sm:$0xff] %v268
          %281 = vst [vmem:[%s277 + $0x18] sm:$0xff] %v269
        $region48: #{tpu_custom_call.1} parent=31 // pred_fallthru
          _
        %v282 = vld [vmem:[#allocation4] sm:$0xf]
        %v283 = vld [vmem:[#allocation4 + $0x4] sm:$0xf]
        %v284 = vld [vmem:[#allocation4 + $0x8] sm:$0xf]
        %v285 = vld [vmem:[#allocation4 + $0xc] sm:$0xf]
        %v286 = vld [vmem:[#allocation4 + $0x10] sm:$0xf]
        %v287 = vld [vmem:[#allocation4 + $0x14] sm:$0xf]
        %v288 = vld [vmem:[#allocation4 + $0x18] sm:$0xf]
        %v289 = vld [vmem:[#allocation4 + $0x1c] sm:$0xf]
        %s290 = sshra.s32 %s235, 4
        %s291 = sand.u32 %s235, 15
        %s292 = smul.addr %s290, 8
        %s293 = scalar_lea.vmem [#allocation2], %s292
        %v294 = vld [vmem:[%s293] sm:$0xff]
        %v295 = vld [vmem:[%s293 + $0x8] sm:$0xff]
        %v296 = vld [vmem:[%s293 + $0x10] sm:$0xff]
        %v297 = vld [vmem:[%s293 + $0x18] sm:$0xff]
        %v306 = vunpack.c.l.b16 %v282
        %v307 = vunpack.c.l.b16 %v283
        %v308 = vunpack.c.l.b16 %v284
        %v309 = vunpack.c.l.b16 %v285
        %v310 = vunpack.c.l.b16 %v286
        %v311 = vunpack.c.l.b16 %v287
        %v312 = vunpack.c.l.b16 %v288
        %v313 = vunpack.c.l.b16 %v289
        %v314 = vpack.c.b16 %v307, %v306
        %v315 = vpack.c.b16 %v309, %v308
        %v316 = vpack.c.b16 %v311, %v310
        %v317 = vpack.c.b16 %v313, %v312
        %vm318 = vcmask 523264
        %v320 = vsel %vm318, %v314, 0
        %v323 = vsel %vm318, %v315, 0
        %v326 = vsel %vm318, %v316, 0
        %v329 = vsel %vm318, %v317, 0
        %331 = vmatprep.subr.bf16.mxu0 0
        %332 = vmatpush1.bf16.msra.mxu0 %v294
        %333 = vmatprep.subr.bf16.mxu0 0
        %334 = vmatpush1.bf16.msra.mxu0 %v295
        %335 = vmatprep.subr.bf16.mxu0 0
        %336 = vmatpush1.bf16.msra.mxu0 %v296
        %337 = vmatprep.subr.bf16.mxu0 0
        %338 = vmatpush1.bf16.msra.mxu0 %v297
        %339 = vmatprep.subr.bf16.mxu0 0
        %340 = vmatpush1.bf16.msra.mxu0 0
        %341 = vmatprep.subr.bf16.mxu0 0
        %342 = vmatpush1.bf16.msra.mxu0 0
        %343 = vmatprep.subr.bf16.mxu0 0
        %344 = vmatpush1.bf16.msra.mxu0 0
        %345 = vmatprep.subr.bf16.mxu0 0
        %346 = vmatpush1.bf16.msra.mxu0 0
        %347 = vmatprep.subr.bf16.mxu0 0
        %348 = vmatpush1.bf16.msra.mxu0 0
        %349 = vmatprep.subr.bf16.mxu0 0
        %350 = vmatpush1.bf16.msra.mxu0 0
        %351 = vmatprep.subr.bf16.mxu0 0
        %352 = vmatpush1.bf16.msra.mxu0 0
        %353 = vmatprep.subr.bf16.mxu0 0
        %354 = vmatpush1.bf16.msra.mxu0 0
        %355 = vmatprep.subr.bf16.mxu0 0
        %356 = vmatpush1.bf16.msra.mxu0 0
        %357 = vmatprep.subr.bf16.mxu0 0
        %358 = vmatpush1.bf16.msra.mxu0 0
        %359 = vmatprep.subr.bf16.mxu0 0
        %360 = vmatpush1.bf16.msra.mxu0 0
        %361 = vmatprep.subr.bf16.mxu0 0
        %362 = vmatpush1.bf16.msra.mxu0 0
        %363 = vmatprep.mubr.bf16.mxu0 0
        %364 = vmatmul.mubr.bf16.gmra.mrb[0].mxu0 %v320
        %v365 = vpop.f32.mrb[0].mxu0
        %v366 = vadd.f32 0.0, %v365
        %v367 = vpop.f32.mrb[0].mxu0
        %v368 = vpop.f32.mrb[0].mxu0
        %v369 = vadd.f32 0.0, %v368
        %v370 = vpop.f32.mrb[0].mxu0
        %371 = vmatprep.mubr.bf16.mxu0 0
        %372 = vmatmul.mubr.bf16.gmra.mrb[0].mxu0 %v323
        %v373 = vpop.f32.mrb[0].mxu0
        %v374 = vadd.f32 0.0, %v373
        %v375 = vpop.f32.mrb[0].mxu0
        %v376 = vpop.f32.mrb[0].mxu0
        %v377 = vadd.f32 0.0, %v376
        %v378 = vpop.f32.mrb[0].mxu0
        %379 = vmatprep.mubr.bf16.mxu0 0
        %380 = vmatmul.mubr.bf16.gmra.mrb[0].mxu0 %v326
        %v381 = vpop.f32.mrb[0].mxu0
        %v382 = vadd.f32 0.0, %v381
        %v383 = vpop.f32.mrb[0].mxu0
        %v384 = vpop.f32.mrb[0].mxu0
        %v385 = vadd.f32 0.0, %v384
        %v386 = vpop.f32.mrb[0].mxu0
        %387 = vmatprep.mubr.bf16.mxu0 0
        %388 = vmatmul.mubr.bf16.gmra.mrb[0].mxu0 %v329
        %v389 = vpop.f32.mrb[0].mxu0
        %v390 = vadd.f32 0.0, %v389
        %v391 = vpop.f32.mrb[0].mxu0
        %v392 = vpop.f32.mrb[0].mxu0
        %v393 = vadd.f32 0.0, %v392
        %v394 = vpop.f32.mrb[0].mxu0
        %395 = vdwg.mxu0
        %p396 = scmp.eq.s32.totalorder %s24, 0
        // Predicated region
        $region49: #{tpu_custom_call.1} parent=31 // pred_check
          %p397 = pneg %p396
        $region50: #{tpu_custom_call.1} parent=31 // pred_check_branch
          %399 = sbr.rel (%p397) target = $region52
        $region51: #{tpu_custom_call.1} parent=31 // pred_region
          %400 = vst [vmem:[#allocation3] sm:$0xff] %v366
          %401 = vst [vmem:[#allocation3 + $0x8] sm:$0xff] %v369
          %402 = vst [vmem:[#allocation3 + $0x10] sm:$0xff] %v374
          %403 = vst [vmem:[#allocation3 + $0x18] sm:$0xff] %v377
          %404 = vst [vmem:[#allocation3 + $0x20] sm:$0xff] %v382
          %405 = vst [vmem:[#allocation3 + $0x28] sm:$0xff] %v385
          %406 = vst [vmem:[#allocation3 + $0x30] sm:$0xff] %v390
          %407 = vst [vmem:[#allocation3 + $0x38] sm:$0xff] %v393
        $region52: #{tpu_custom_call.1} parent=31 // pred_fallthru
          _
        %p408 = scmp.ne.s32.totalorder %s24, 0
        // Predicated region
        $region53: #{tpu_custom_call.1} parent=31 // pred_check
          %p409 = pneg %p408
        $region54: #{tpu_custom_call.1} parent=31 // pred_check_branch
          %411 = sbr.rel (%p409) target = $region56
        $region55: #{tpu_custom_call.1} parent=31 // pred_region
          %v412 = vld [vmem:[#allocation3] sm:$0xff]
          %v413 = vld [vmem:[#allocation3 + $0x8] sm:$0xff]
          %v414 = vld [vmem:[#allocation3 + $0x10] sm:$0xff]
          %v415 = vld [vmem:[#allocation3 + $0x18] sm:$0xff]
          %v416 = vld [vmem:[#allocation3 + $0x20] sm:$0xff]
          %v417 = vld [vmem:[#allocation3 + $0x28] sm:$0xff]
          %v418 = vld [vmem:[#allocation3 + $0x30] sm:$0xff]
          %v419 = vld [vmem:[#allocation3 + $0x38] sm:$0xff]
          %v420 = vadd.f32 %v412, %v366
          %v421 = vadd.f32 %v413, %v369
          %v422 = vadd.f32 %v414, %v374
          %v423 = vadd.f32 %v415, %v377
          %v424 = vadd.f32 %v416, %v382
          %v425 = vadd.f32 %v417, %v385
          %v426 = vadd.f32 %v418, %v390
          %v427 = vadd.f32 %v419, %v393
          %428 = vst [vmem:[#allocation3] sm:$0xff] %v420
          %429 = vst [vmem:[#allocation3 + $0x8] sm:$0xff] %v421
          %430 = vst [vmem:[#allocation3 + $0x10] sm:$0xff] %v422
          %431 = vst [vmem:[#allocation3 + $0x18] sm:$0xff] %v423
          %432 = vst [vmem:[#allocation3 + $0x20] sm:$0xff] %v424
          %433 = vst [vmem:[#allocation3 + $0x28] sm:$0xff] %v425
          %434 = vst [vmem:[#allocation3 + $0x30] sm:$0xff] %v426
          %435 = vst [vmem:[#allocation3 + $0x38] sm:$0xff] %v427
        $region56: #{tpu_custom_call.1} parent=31 // pred_fallthru
          _
        // Predicated region
        $region57: #{tpu_custom_call.1} parent=31 // pred_check
          %p436 = pneg %p396
        $region58: #{tpu_custom_call.1} parent=31 // pred_check_branch
          %438 = sbr.rel (%p436) target = $region60
        $region59: #{tpu_custom_call.1} parent=31 // pred_region
          %v439 = vld [vmem:[#allocation3] sm:$0xff]
          %v440 = vld [vmem:[#allocation3 + $0x8] sm:$0xff]
          %v441 = vld [vmem:[#allocation3 + $0x10] sm:$0xff]
          %v442 = vld [vmem:[#allocation3 + $0x18] sm:$0xff]
          %v443 = vld [vmem:[#allocation3 + $0x20] sm:$0xff]
          %v444 = vld [vmem:[#allocation3 + $0x28] sm:$0xff]
          %v445 = vld [vmem:[#allocation3 + $0x30] sm:$0xff]
          %v446 = vld [vmem:[#allocation3 + $0x38] sm:$0xff]
          %p447 = scmp.ne.s32.totalorder %s22, 2
          // Predicated region
          $region61: #{tpu_custom_call.1} parent=59 // pred_check
            %p448 = pneg %p447
          $region62: #{tpu_custom_call.1} parent=59 // pred_check_branch
            %450 = sbr.rel (%p448) target = $region64
          $region63: #{tpu_custom_call.1} parent=59 // pred_region
            %v451 = vpack.c.bf16 %v440, %v439
            %v452 = vpack.c.bf16 %v442, %v441
            %v453 = vpack.c.bf16 %v444, %v443
            %v454 = vpack.c.bf16 %v446, %v445
            %s455 = sshra.s32 %s237, 4
            %s456 = sand.u32 %s237, 15
            %s457 = smul.addr %s455, 8
            %s458 = scalar_lea.vmem [#allocation2], %s457
            %459 = vst [vmem:[%s458] sm:$0xff] %v451
            %460 = vst [vmem:[%s458 + $0x8] sm:$0xff] %v452
            %461 = vst [vmem:[%s458 + $0x10] sm:$0xff] %v453
            %462 = vst [vmem:[%s458 + $0x18] sm:$0xff] %v454
          $region64: #{tpu_custom_call.1} parent=59 // pred_fallthru
            _
          // Predicated region
          $region65: #{tpu_custom_call.1} parent=59 // pred_check
            %p463 = pneg %p238
          $region66: #{tpu_custom_call.1} parent=59 // pred_check_branch
            %465 = sbr.rel (%p463) target = $region68
          $region67: #{tpu_custom_call.1} parent=59 // pred_region
            %v466 = vld [vmem:[#allocation7] sm:$0xff]
            %v467 = vld [vmem:[#allocation7 + $0x8] sm:$0xff]
            %v468 = vld [vmem:[#allocation7 + $0x10] sm:$0xff]
            %v469 = vld [vmem:[#allocation7 + $0x18] sm:$0xff]
            %v470 = vld [vmem:[#allocation7 + $0x20] sm:$0xff]
            %v471 = vld [vmem:[#allocation7 + $0x28] sm:$0xff]
            %v472 = vld [vmem:[#allocation7 + $0x30] sm:$0xff]
            %v473 = vld [vmem:[#allocation7 + $0x38] sm:$0xff]
            %v474 = vadd.f32 %v466, %v439
            %v475 = vadd.f32 %v467, %v440
            %v476 = vadd.f32 %v468, %v441
            %v477 = vadd.f32 %v469, %v442
            %v478 = vadd.f32 %v470, %v443
            %v479 = vadd.f32 %v471, %v444
            %v480 = vadd.f32 %v472, %v445
            %v481 = vadd.f32 %v473, %v446
            %s482 = scalar_lea.vmem [#allocation10], %s231
            %483 = vst [vmem:[%s482] sm:$0xff] %v474
            %484 = vst [vmem:[%s482 + $0x8] sm:$0xff] %v475
            %485 = vst [vmem:[%s482 + $0x10] sm:$0xff] %v476
            %486 = vst [vmem:[%s482 + $0x18] sm:$0xff] %v477
            %487 = vst [vmem:[%s482 + $0x20] sm:$0xff] %v478
            %488 = vst [vmem:[%s482 + $0x28] sm:$0xff] %v479
            %489 = vst [vmem:[%s482 + $0x30] sm:$0xff] %v480
            %490 = vst [vmem:[%s482 + $0x38] sm:$0xff] %v481
          $region68: #{tpu_custom_call.1} parent=59 // pred_fallthru
            _
          %p491 = scmp.ne.s32.totalorder %s22, 0
          // Predicated region
          $region69: #{tpu_custom_call.1} parent=59 // pred_check
            %p492 = pneg %p491
          $region70: #{tpu_custom_call.1} parent=59 // pred_check_branch
            %494 = sbr.rel (%p492) target = $region72
          $region71: #{tpu_custom_call.1} parent=59 // pred_region
            %s495 = scalar_lea.vmem [#allocation10], %s231
            %v496 = vld [vmem:[%s495] sm:$0xff]
            %v497 = vld [vmem:[%s495 + $0x8] sm:$0xff]
            %v498 = vld [vmem:[%s495 + $0x10] sm:$0xff]
            %v499 = vld [vmem:[%s495 + $0x18] sm:$0xff]
            %v500 = vld [vmem:[%s495 + $0x20] sm:$0xff]
            %v501 = vld [vmem:[%s495 + $0x28] sm:$0xff]
            %v502 = vld [vmem:[%s495 + $0x30] sm:$0xff]
            %v503 = vld [vmem:[%s495 + $0x38] sm:$0xff]
            %v504 = vadd.f32 %v496, %v439
            %v505 = vadd.f32 %v497, %v440
            %v506 = vadd.f32 %v498, %v441
            %v507 = vadd.f32 %v499, %v442
            %v508 = vadd.f32 %v500, %v443
            %v509 = vadd.f32 %v501, %v444
            %v510 = vadd.f32 %v502, %v445
            %v511 = vadd.f32 %v503, %v446
            %512 = vst [vmem:[%s495] sm:$0xff] %v504
            %513 = vst [vmem:[%s495 + $0x8] sm:$0xff] %v505
            %514 = vst [vmem:[%s495 + $0x10] sm:$0xff] %v506
            %515 = vst [vmem:[%s495 + $0x18] sm:$0xff] %v507
            %516 = vst [vmem:[%s495 + $0x20] sm:$0xff] %v508
            %517 = vst [vmem:[%s495 + $0x28] sm:$0xff] %v509
            %518 = vst [vmem:[%s495 + $0x30] sm:$0xff] %v510
            %519 = vst [vmem:[%s495 + $0x38] sm:$0xff] %v511
          $region72: #{tpu_custom_call.1} parent=59 // pred_fallthru
            _
          %p520 = scmp.eq.s32.totalorder %s22, 2
          // Predicated region
          $region73: #{tpu_custom_call.1} parent=59 // pred_check
            %p521 = pneg %p520
          $region74: #{tpu_custom_call.1} parent=59 // pred_check_branch
            %523 = sbr.rel (%p521) target = $region76
          $region75: #{tpu_custom_call.1} parent=59 // pred_region
            %s524 = scalar_lea.vmem [#allocation10], %s231
            %v525 = vld [vmem:[%s524] sm:$0xff]
            %v526 = vld [vmem:[%s524 + $0x8] sm:$0xff]
            %v527 = vld [vmem:[%s524 + $0x10] sm:$0xff]
            %v528 = vld [vmem:[%s524 + $0x18] sm:$0xff]
            %v529 = vld [vmem:[%s524 + $0x20] sm:$0xff]
            %v530 = vld [vmem:[%s524 + $0x28] sm:$0xff]
            %v531 = vld [vmem:[%s524 + $0x30] sm:$0xff]
            %v532 = vld [vmem:[%s524 + $0x38] sm:$0xff]
            %v533 = vmul.f32 %v525, 0.25
            %v534 = vmul.f32 %v526, 0.25
            %v535 = vmul.f32 %v527, 0.25
            %v536 = vmul.f32 %v528, 0.25
            %v537 = vmul.f32 %v529, 0.25
            %v538 = vmul.f32 %v530, 0.25
            %v539 = vmul.f32 %v531, 0.25
            %v540 = vmul.f32 %v532, 0.25
            %541 = vst [vmem:[%s524] sm:$0xff] %v533
            %542 = vst [vmem:[%s524 + $0x8] sm:$0xff] %v534
            %543 = vst [vmem:[%s524 + $0x10] sm:$0xff] %v535
            %544 = vst [vmem:[%s524 + $0x18] sm:$0xff] %v536
            %545 = vst [vmem:[%s524 + $0x20] sm:$0xff] %v537
            %546 = vst [vmem:[%s524 + $0x28] sm:$0xff] %v538
            %547 = vst [vmem:[%s524 + $0x30] sm:$0xff] %v539
            %548 = vst [vmem:[%s524 + $0x38] sm:$0xff] %v540
          $region76: #{tpu_custom_call.1} parent=59 // pred_fallthru
            _
        $region60: #{tpu_custom_call.1} parent=31 // pred_fallthru
          _
        // Predicated region
        $region77: #{tpu_custom_call.1} parent=31 // pred_check
          %p549 = pneg %p129
        $region78: #{tpu_custom_call.1} parent=31 // pred_check_branch
          %551 = sbr.rel (%p549) target = $region80
        $region79: #{tpu_custom_call.1} parent=31 // pred_region
          %s553 = ssub.s32 1024, 1024
          %554 = vsyncadd [#allocation6], %s553
          %s555 = sshll.u32 [#allocation10], 4
          %s556 = int_to_ptr.vmem [resolvable:$true] %s555
          %561 = dma.vmem_to_hbm [thread:$0]  %s556, 1024, %s3, [#allocation6], 128, 128, 8
        $region80: #{tpu_custom_call.1} parent=31 // pred_fallthru
          _
        // Predicated region
        $region81: #{tpu_custom_call.1} parent=31 // pred_check
          %p562 = pneg %p129
        $region82: #{tpu_custom_call.1} parent=31 // pred_check_branch
          %564 = sbr.rel (%p562) target = $region84
        $region83: #{tpu_custom_call.1} parent=31 // pred_region
          %565 = dma.done [#allocation6], 1024
        $region84: #{tpu_custom_call.1} parent=31 // pred_fallthru
          _
      $region32: #{tpu_custom_call.1} parent=5 // pred_fallthru
        _
      %p566 = scmp.le.s32.totalorder 2, %s12
      // Predicated region
      $region85: #{tpu_custom_call.1} parent=5 // pred_check
        %p567 = pneg %p566
      $region86: #{tpu_custom_call.1} parent=5 // pred_check_branch
        %569 = sbr.rel (%p567) target = $region88
      $region87: #{tpu_custom_call.1} parent=5 // pred_region
        %s570 = ssub.s32 %s12, 2
      $region88: #{tpu_custom_call.1} parent=5 // pred_fallthru
        _
    $region6: #{tpu_custom_call.1} parent=1 // loop_footer
      %s16 = sadd.s32 1, %s12
    $region7: #{tpu_custom_call.1} parent=1 // loop_footer_branch
      %11 = sbr.rel target = $region3
    $region8: #{tpu_custom_call.1} parent=1 // loop_exit
      _
    %571 = vsyncpa [#allocation5], 1
    %s572 = scalar_lea.sflag [#allocation5], 1
    %573 = vsyncpa %s572, 1
    %574 = vsyncpa [#allocation8], 1
    %575 = vsyncpa [#allocation6], 1
    %s576 = scalar_lea.sflag [#allocation6], 1
    %577 = vsyncpa %s576, 1

</llo_original>
